<compile_context>
chip_gen: v5e
topology: v5e:2x2
jax: 0.10.0
libtpu: 0.0.40
codegen_flags: <defaults>
</compile_context>

<pallas_src>
import functools

import jax
import jax.numpy as jnp
from jax.experimental import pallas as pl
from jax.experimental.pallas import tpu as pltpu


def _joints_sse_kernel(pred_ref, gt_ref, w_ref, partial_ref, *,
                       use_target_weight: bool, total_rows: int,
                       tile_rows: int):
    """One grid step reduces one (tile_rows, HW) slab of the flattened
    heatmaps into a single raw sum-of-squared-(weighted-)diffs partial."""
    pred = pred_ref[...].astype(jnp.float32)   # (TR, HW)
    gt = gt_ref[...].astype(jnp.float32)       # (TR, HW)

    diff = pred - gt
    if use_target_weight:
        # (pred - gt) * w == pred*w - gt*w -> one multiply per element.
        diff = diff * w_ref[...].astype(jnp.float32)   # (TR, 1) broadcasts over HW

    sq = diff * diff

    if total_rows % tile_rows != 0:
        # Last (partial) tile hangs past the array: zero the padded rows so
        # garbage (possibly NaN/Inf) in the out-of-bounds region cannot leak in.
        row = (pl.program_id(0) * tile_rows
               + jax.lax.broadcasted_iota(jnp.int32, sq.shape, 0))
        sq = jnp.where(row < total_rows, sq, jnp.float32(0.0))

    partial_ref[0, 0] = jnp.sum(sq)


def _choose_tile_rows(num_rows: int, hw: int, itemsize: int) -> int:
    """Largest multiple-of-8 row count with ~<=1 MiB per heatmap block."""
    target_block_bytes = 1 << 20
    tr = (target_block_bytes // max(hw * itemsize, 1)) // 8 * 8
    tr = max(tr, 8)
    rows_ceil = -(-num_rows // 8) * 8
    return min(tr, rows_ceil)


def joints_mse_loss(output, target, target_weight, *, use_target_weight: bool):
    """output, target: (B, J, H, W); target_weight: (B, J, 1).  Returns scalar f32."""
    B, J, H, W = output.shape
    HW = H * W
    R = B * J

    # Contiguous, metadata-only flattens (no HBM transpose/copy).
    pred = output.reshape(R, HW)
    gt = target.reshape(R, HW)
    tw = target_weight.reshape(R, 1)

    tile_rows = _choose_tile_rows(R, HW, jnp.dtype(output.dtype).itemsize)
    num_tiles = -(-R // tile_rows)

    kernel = functools.partial(
        _joints_sse_kernel,
        use_target_weight=use_target_weight,
        total_rows=R,
        tile_rows=tile_rows,
    )

    partials = pl.pallas_call(
        kernel,
        out_shape=jax.ShapeDtypeStruct((num_tiles, 1), jnp.float32),
        grid_spec=pltpu.PrefetchScalarGridSpec(
            num_scalar_prefetch=0,
            grid=(num_tiles,),
            in_specs=[
                pl.BlockSpec((tile_rows, HW), lambda i: (i, 0)),
                pl.BlockSpec((tile_rows, HW), lambda i: (i, 0)),
                pl.BlockSpec((tile_rows, 1), lambda i: (i, 0)),
            ],
            out_specs=pl.BlockSpec((1, 1), lambda i: (i, 0),
                                   memory_space=pltpu.SMEM),
        ),
        compiler_params=pltpu.CompilerParams(
            # Independent per-tile partials: no carried state, so the grid may
            # be sharded across TensorCores (v7x megacore); harmless elsewhere.
            dimension_semantics=("parallel",),
        ),
    )(pred, gt, tw)

    factor = 1.0 if use_target_weight else 0.5
    scale = factor * 100.0 / (J * B * HW)
    return jnp.sum(partials) * jnp.float32(scale)


def _reference_loss(output, target, target_weight, use_target_weight):
    """Pure-JAX port of the PyTorch forward, for verification."""
    B, J, H, W = output.shape
    hp = output.reshape(B, J, H * W)
    hg = target.reshape(B, J, H * W)
    loss = 0.0
    for idx in range(J):
        p = hp[:, idx, :]
        g = hg[:, idx, :]
        if use_target_weight:
            w = target_weight[:, idx]            # (B, 1)
            loss = loss + jnp.mean((p * w - g * w) ** 2)
        else:
            loss = loss + 0.5 * jnp.mean((p - g) ** 2)
    return loss * 100.0 / J


if __name__ == "__main__":
    key = jax.random.PRNGKey(0)
    k1, k2, k3 = jax.random.split(key, 3)

    B, J, H, W = 2, 4, 16, 16
    output = jax.random.normal(k1, (B, J, H, W), dtype=jnp.float32)
    target = jax.random.normal(k2, (B, J, H, W), dtype=jnp.float32)
    target_weight = jax.random.uniform(k3, (B, J, 1), dtype=jnp.float32)

    ok = True
    for use_tw in (True, False):
        got = jax.block_until_ready(
            joints_mse_loss(output, target, target_weight, use_target_weight=use_tw)
        )
        want = _reference_loss(output, target, target_weight, use_tw)
        if not jnp.allclose(got, want, rtol=1e-5, atol=1e-5):
            ok = False
            print(f"MISMATCH use_target_weight={use_tw}: got {got}, want {want}")

    if ok:
        print("KERNEL_OK")
</pallas_src>

<mosaic_0001>
module attributes {stable_mosaic.version = 11 : i64} {
  func.func @_joints_sse_kernel(%arg0: i32, %arg1: memref<8x256xf32, #tpu.memory_space<vmem>>, %arg2: memref<8x256xf32, #tpu.memory_space<vmem>>, %arg3: memref<8x1xf32, #tpu.memory_space<vmem>>, %arg4: memref<1x1xf32, #tpu.memory_space<smem>>) attributes {dimension_semantics = [#tpu.dimension_semantics<parallel>], iteration_bounds = array<i64: 1>, scalar_prefetch = 0 : i64, scratch_operands = 0 : i64, tpu.core_type = #tpu.core_type<tc>, window_params = [{transform_indices = @transform_0, window_bounds = array<i64: 8, 256>}, {transform_indices = @transform_1, window_bounds = array<i64: 8, 256>}, {transform_indices = @transform_2, window_bounds = array<i64: 8, 1>}, {transform_indices = @transform_3, window_bounds = array<i64: 1, 1>}]} {
    %c0 = arith.constant 0 : index
    %c0_0 = arith.constant 0 : index
    %0 = vector.load %arg1[%c0, %c0_0] : memref<8x256xf32, #tpu.memory_space<vmem>>, vector<8x256xf32>
    %c0_1 = arith.constant 0 : index
    %c0_2 = arith.constant 0 : index
    %1 = vector.load %arg2[%c0_1, %c0_2] : memref<8x256xf32, #tpu.memory_space<vmem>>, vector<8x256xf32>
    %2 = arith.subf %0, %1 : vector<8x256xf32>
    %c0_3 = arith.constant 0 : index
    %c0_4 = arith.constant 0 : index
    %3 = vector.load %arg3[%c0_3, %c0_4] : memref<8x1xf32, #tpu.memory_space<vmem>>, vector<8x1xf32>
    %4 = vector.broadcast %3 : vector<8x1xf32> to vector<8x256xf32>
    %5 = arith.mulf %2, %4 : vector<8x256xf32>
    %6 = arith.mulf %5, %5 : vector<8x256xf32>
    %7 = vector.shape_cast %6 : vector<8x256xf32> to vector<1x8x256xf32>
    %cst = arith.constant dense<0.000000e+00> : vector<1xf32>
    %8 = vector.multi_reduction <add>, %7, %cst [1, 2] : vector<1x8x256xf32> to vector<1xf32>
    %9 = vector.shape_cast %8 : vector<1xf32> to vector<1x1x1xf32>
    %10 = vector.extract %9[0, 0, 0] : f32 from vector<1x1x1xf32>
    %c0_5 = arith.constant 0 : index
    %c0_6 = arith.constant 0 : index
    %11 = memref.load %arg4[%c0_5, %c0_6] : memref<1x1xf32, #tpu.memory_space<smem>>
    memref.store %10, %arg4[%c0_5, %c0_6] : memref<1x1xf32, #tpu.memory_space<smem>>
    return
  }
  func.func @transform_0(%arg0: i32) -> (i32, i32) {
    %c0_i32 = arith.constant 0 : i32
    %c0_i32_0 = arith.constant 0 : i32
    return %arg0, %c0_i32 : i32, i32
  }
  func.func @transform_1(%arg0: i32) -> (i32, i32) {
    %c0_i32 = arith.constant 0 : i32
    %c0_i32_0 = arith.constant 0 : i32
    return %arg0, %c0_i32 : i32, i32
  }
  func.func @transform_2(%arg0: i32) -> (i32, i32) {
    %c0_i32 = arith.constant 0 : i32
    %c0_i32_0 = arith.constant 0 : i32
    return %arg0, %c0_i32 : i32, i32
  }
  func.func @transform_3(%arg0: i32) -> (i32, i32) {
    %c0_i32 = arith.constant 0 : i32
    %c0_i32_0 = arith.constant 0 : i32
    return %arg0, %c0_i32 : i32, i32
  }
}

</mosaic_0001>

<llo_original>
// kernel: tpu_custom_call.1
$region0: #{tpu_custom_call.1}
  #allocation0 [shape = 'u32[]', space=smem, size = 0x4, offset = 0x4, fixed_abs, tag = 'smem constant byte address 0x4 - core index']
  #allocation1 [shape = 'u32[72,128]{1,0:T(1,128)}', space=vmem, size = 0x9000, scoped, tag = 'internal scratch']
  %s0 = inlined_call_operand.hbm [shape: f32[8,256], index: 0, kind: input, shape index: {}]
  %s1 = inlined_call_operand.hbm [shape: f32[8,256], index: 1, kind: input, shape index: {}]
  %s2 = inlined_call_operand.vmem [shape: f32[8,1], index: 2, kind: input, shape index: {}]
  %s3 = inlined_call_operand.hbm [shape: f32[1,1], index: 3, kind: output, shape index: {}]
  %s4 = sld [smem:[#allocation0]]
  $region30: #{tpu_custom_call.1} parent=0
    _
  %s6 = ssub.s32 1, %s4
  %s7 = scalar_select 0, %s6, %s4
  $region1: #{tpu_custom_call.1} parent=0
    #allocation2 [shape = 'u8[8192]{0}', space=vmem, size = 0x2000, scoped, tag = 'input window, operand 0, single buffered']
    #allocation3 [shape = 's32[1]{0}', space=sflag, size = 0x4, scoped, tag = 'scoped memory for tpu_custom_call.1']
    #allocation4 [shape = 's32[1]{0}', space=sflag, size = 0x4, scoped, tag = 'scoped memory for tpu_custom_call.1']
    #allocation5 [shape = 'u8[8192]{0}', space=vmem, size = 0x2000, scoped, tag = 'input window, operand 1, single buffered']
    #allocation6 [shape = 's32[1]{0}', space=sflag, size = 0x4, scoped, tag = 'scoped memory for tpu_custom_call.1']
    #allocation7 [shape = 'u8[512]{0}', space=smem, size = 0x200, scoped, tag = 'output window, operand 0, single buffered']
    %8 = vsyncpa [#allocation3], 0
    %9 = vsyncpa [#allocation6], 0
    %10 = vsyncpa [#allocation4], 0
    // Predicated region
    $region2: #{tpu_custom_call.1} parent=1 // pred_check
      _
    $region3: #{tpu_custom_call.1} parent=1 // pred_check_branch
      %12 = sbr.rel (0) target = $region5
    $region4: #{tpu_custom_call.1} parent=1 // pred_region
      %14 = vsyncadd [#allocation3], 0
      %s16 = sshll.u32 %s0, 4
      %s17 = int_to_ptr.hbm [resolvable:$true] %s16
      %s18 = sshll.u32 [#allocation2], 4
      %s19 = int_to_ptr.vmem [resolvable:$true] %s18
      %21 = dma.hbm_to_vmem [thread:$0]  %s17, 256, %s19, [#allocation3]
    $region5: #{tpu_custom_call.1} parent=1 // pred_fallthru
      _
    // Predicated region
    $region6: #{tpu_custom_call.1} parent=1 // pred_check
      _
    $region7: #{tpu_custom_call.1} parent=1 // pred_check_branch
      %23 = sbr.rel (0) target = $region9
    $region8: #{tpu_custom_call.1} parent=1 // pred_region
      %25 = vsyncadd [#allocation6], 0
      %s27 = sshll.u32 %s1, 4
      %s28 = int_to_ptr.hbm [resolvable:$true] %s27
      %s29 = sshll.u32 [#allocation5], 4
      %s30 = int_to_ptr.vmem [resolvable:$true] %s29
      %32 = dma.hbm_to_vmem [thread:$0]  %s28, 256, %s30, [#allocation6]
    $region9: #{tpu_custom_call.1} parent=1 // pred_fallthru
      _
    // Predicated region
    $region10: #{tpu_custom_call.1} parent=1 // pred_check
      _
    $region11: #{tpu_custom_call.1} parent=1 // pred_check_branch
      %34 = sbr.rel (0) target = $region13
    $region12: #{tpu_custom_call.1} parent=1 // pred_region
      _
    $region13: #{tpu_custom_call.1} parent=1 // pred_fallthru
      _
    // Predicated region
    $region14: #{tpu_custom_call.1} parent=1 // pred_check
      _
    $region15: #{tpu_custom_call.1} parent=1 // pred_check_branch
      %36 = sbr.rel (0) target = $region17
    $region16: #{tpu_custom_call.1} parent=1 // pred_region
      %38 = dma.done [#allocation3], 256
    $region17: #{tpu_custom_call.1} parent=1 // pred_fallthru
      _
    // Predicated region
    $region18: #{tpu_custom_call.1} parent=1 // pred_check
      _
    $region19: #{tpu_custom_call.1} parent=1 // pred_check_branch
      %40 = sbr.rel (0) target = $region21
    $region20: #{tpu_custom_call.1} parent=1 // pred_region
      %42 = dma.done [#allocation6], 256
    $region21: #{tpu_custom_call.1} parent=1 // pred_fallthru
      _
    %v43 = vld [vmem:[#allocation2] sm:$0xff]
    %v44 = vld [vmem:[#allocation2 + $0x8] sm:$0xff]
    %v45 = vld [vmem:[#allocation5] sm:$0xff]
    %v46 = vld [vmem:[#allocation5 + $0x8] sm:$0xff]
    %v47 = vsub.f32 %v43, %v45
    %v48 = vsub.f32 %v44, %v46
    %v49 = vld [vmem:[%s2] sm:$0xff]
    %51 = vset.pattern.permute.xlu0 0
    %52 = vperm.xlu0 %51, %v49
    %v53 = vpop.permute.xlu0 %52
    %v55 = vmul.f32 %v47, %v53
    %v56 = vmul.f32 %v48, %v53
    %v57 = vmul.f32 %v55, %v55
    %v58 = vmul.f32 %v56, %v56
    %v59 = vadd.f32 %v57, %v58
    %60 = vadd.xlane.f32.xlu0 %v59
    %v61 = vpop.xlane.xlu0 %60
    %v62 = vrot.slane %v61, 4
    %v63 = vadd.f32 %v61, %v62
    %v64 = vrot.slane %v63, 2
    %v65 = vadd.f32 %v63, %v64
    %v66 = vrot.slane %v65, 1
    %v67 = vadd.f32 %v65, %v66
    %s68 = vtos %v67
    %s69 = scalar_lea.smem [#allocation7], 0
    %70 = sst [smem:[%s69]] %s68
    // Predicated region
    $region22: #{tpu_custom_call.1} parent=1 // pred_check
      _
    $region23: #{tpu_custom_call.1} parent=1 // pred_check_branch
      %72 = sbr.rel (0) target = $region25
    $region24: #{tpu_custom_call.1} parent=1 // pred_region
      %74 = vsyncadd [#allocation4], 0
      %s76 = sshll.u32 %s3, 4
      %s77 = int_to_ptr.hbm [resolvable:$true] %s76
      %79 = dma.smem_to_hbm [#allocation7], 16, %s77, [#allocation4]
    $region25: #{tpu_custom_call.1} parent=1 // pred_fallthru
      _
    // Predicated region
    $region26: #{tpu_custom_call.1} parent=1 // pred_check
      _
    $region27: #{tpu_custom_call.1} parent=1 // pred_check_branch
      %81 = sbr.rel (0) target = $region29
    $region28: #{tpu_custom_call.1} parent=1 // pred_region
      %83 = dma.done [#allocation4], 16
    $region29: #{tpu_custom_call.1} parent=1 // pred_fallthru
      _
    %84 = sfence
    %85 = vsyncpa [#allocation3], 1
    %86 = vsyncpa [#allocation6], 1
    %87 = vsyncpa [#allocation4], 1

</llo_original>
